<compile_context>
chip_gen: v7x
topology: tpu7x:2x2x1
jax: 0.10.0
libtpu: 0.0.40
codegen_flags: <defaults>
</compile_context>

<pallas_src>
import jax
import jax.numpy as jnp
from jax import lax
from jax.experimental import pallas as pl
from jax.experimental.pallas import tpu as pltpu


def _stage_taps(col_ref, val, k_taps, pad):
    """col_ref[b, t, k*C:(k+1)*C] <- val[b, t + k - pad, :]  (zero outside [0, T)).

    `val` is an f32 (Bt, T, C) value; `col_ref` is a bf16 (Bt, T, K*C) VMEM scratch.
    The tiny boundary rows are re-zeroed every grid step (a couple of (Bt,1,C)
    stores) instead of once under pl.when(program_id == 0): with ("parallel",)
    batch sharding on a 2-TC chip (v7x) the second core never sees program_id == 0,
    so the zero-once trick would leave its scratch uninitialised.
    """
    bt, t, c = val.shape
    for k in range(k_taps):
        s = k - pad            # time shift of this tap
        lo = k * c
        hi = lo + c
        if s < 0:
            z = -s
            col_ref[:, :z, lo:hi] = jnp.zeros((bt, z, c), col_ref.dtype)
            col_ref[:, z:, lo:hi] = val[:, :t - z, :].astype(col_ref.dtype)
        elif s == 0:
            col_ref[:, :, lo:hi] = val.astype(col_ref.dtype)
        else:
            col_ref[:, :t - s, lo:hi] = val[:, s:, :].astype(col_ref.dtype)
            col_ref[:, t - s:, lo:hi] = jnp.zeros((bt, s, c), col_ref.dtype)


def _cnn2_kernel(x_ref, w1_ref, w2_ref, bn1_ref, bn2_ref, o_ref, col1_ref, col2_ref):
    """Fused (conv1 -> bn1 -> relu1) -> (conv2 -> bn2 -> relu2) for one batch block.

    x_ref   : (Bt, C_in, T)      bf16 NCT input block (straight from HBM, no transpose pass)
    w1_ref  : (K*C_in,  C_mid)   bf16 im2col conv1 weight (row = k*C_in + ci)
    w2_ref  : (K*C_mid, C_out)   bf16 im2col conv2 weight
    bn1_ref : (2, C_mid)         f32, row0 = scale, row1 = shift (folded eval BN)
    bn2_ref : (2, C_out)         f32
    o_ref   : (Bt, C_out, T)     NCT output block (lane-dense along T at real sizes)
    col1_ref: (Bt, T, K*C_in)    bf16 im2col scratch for conv1
    col2_ref: (Bt, T, K*C_mid)   bf16 im2col scratch for conv2
    """
    Bt, C_in, T = x_ref.shape
    KC_in, C_mid = w1_ref.shape
    KC_mid, C_out = w2_ref.shape
    K = KC_in // C_in
    P = (K - 1) // 2

    # ---- NCT -> NTC inside VMEM (f32 minor-dims transpose is the robust XLU path) ----
    x_tc = jnp.transpose(x_ref[...].astype(jnp.float32), (0, 2, 1))   # (Bt, T, C_in)

    # ---- conv1: taps written straight into the im2col scratch, then one MXU matmul ----
    _stage_taps(col1_ref, x_tc, K, P)
    slab1 = col1_ref[...].reshape(Bt * T, KC_in)
    y1 = jnp.dot(slab1, w1_ref[...], preferred_element_type=jnp.float32)
    # bn1 (eval-mode folded scale/shift) + relu1 ; dropout1 = identity at inference.
    y1 = jnp.maximum(y1 * bn1_ref[0:1, :] + bn1_ref[1:2, :], 0.0)

    # ---- conv2 on the in-register intermediate ----
    _stage_taps(col2_ref, y1.reshape(Bt, T, C_mid), K, P)
    slab2 = col2_ref[...].reshape(Bt * T, KC_mid)
    y2 = jnp.dot(slab2, w2_ref[...], preferred_element_type=jnp.float32)
    y2 = jnp.maximum(y2 * bn2_ref[0:1, :] + bn2_ref[1:2, :], 0.0)

    # ---- NTC -> NCT in VMEM and store ----
    o_ref[...] = jnp.transpose(y2.reshape(Bt, T, C_out), (0, 2, 1)).astype(o_ref.dtype)


def _tpu_vmem_plan():
    """Returns (vmem_limit_bytes or None, Bt byte budget, need >= 2 grid steps)."""
    try:
        kind = jax.devices()[0].device_kind.lower()
    except Exception:
        kind = ""
    mib = 1 << 20
    if "v7" in kind:
        # v7x: 64 MiB physical VMEM per TensorCore, 2 TCs per chip.
        return 48 * mib, int(0.6 * 48 * mib), True
    if "v5" in kind or "v6" in kind:
        # v5e / v6e: 128 MiB physical VMEM, single TensorCore.
        return 100 * mib, int(0.6 * 100 * mib), False
    # Unknown chip: keep the compiler default scoped limit, size blocks conservatively.
    return None, int(0.6 * 32 * mib), False


def _step_vmem_bytes(bt, t, c_in, c_mid, c_out, k, out_bytes):
    """Approximate per-grid-step VMEM footprint for batch block bt."""
    m = bt * t
    b = 2 * (bt * c_in * t) * 2                        # bf16 input block, double-buffered
    b += 2 * (bt * c_out * t) * out_bytes              # output block, double-buffered
    b += (k * c_in * c_mid + k * c_mid * c_out) * 2    # bf16 weights, single-buffered
    b += (2 * c_mid + 2 * c_out) * 4                   # folded BN params
    b += m * k * (c_in + c_mid) * 2                    # im2col scratches (bf16)
    b += m * c_in * 4                                  # transposed-x f32 temporary
    b += m * (c_mid + c_out) * 4                       # y1 / y2 f32 temporaries
    return b


def _pick_batch_block(n, t, c_in, c_mid, c_out, k, out_bytes, budget, two_steps):
    """Largest divisor of n whose per-step VMEM footprint fits the byte budget."""
    # TODO(synk): awkward (prime) N degenerates to Bt=1; a masked tail block would
    # be needed to avoid tiny per-step matmuls in that case.
    divisors = [d for d in range(1, n + 1) if n % d == 0]
    if two_steps and n >= 2:
        divisors = [d for d in divisors if n // d >= 2]   # keep both v7x TCs busy
    best = 1
    for d in divisors:
        if _step_vmem_bytes(d, t, c_in, c_mid, c_out, k, out_bytes) <= budget:
            best = max(best, d)
    return best


def simple_cnn2layer_forward(x_nct, w1_kic, w2_kic, bn1_ss, bn2_ss, *, padding=1,
                             out_dtype=jnp.float32):
    """x_nct: (N, C_in, T) float32 (PyTorch Conv1d layout). Returns (N, C_out, T).

    w1_kic: (K, C_in, C_mid), w2_kic: (K, C_mid, C_out) tap-major conv weights
    (flattened to im2col (K*C, C') so row k*C+c lines up with the slab columns).
    bn1_ss / bn2_ss: (2, C) folded eval-mode BatchNorm scale/shift (float32).
    """
    N, C_in, T = x_nct.shape
    K, _, C_mid = w1_kic.shape
    _, _, C_out = w2_kic.shape
    if 2 * padding != K - 1:
        raise ValueError("kernel implements 'same' convs: needs 2*padding == kernel_size-1")
    # TODO(synk): stride != 1 not implemented (module default stride=1).

    vmem_limit, budget, two_steps = _tpu_vmem_plan()
    out_bytes = jnp.dtype(out_dtype).itemsize
    Bt = _pick_batch_block(N, T, C_in, C_mid, C_out, K, out_bytes, budget, two_steps)

    # bf16 feed at the kernel boundary, f32 MXU accumulation inside.
    x_bf16 = x_nct.astype(jnp.bfloat16)
    w1_im2col = w1_kic.reshape(K * C_in, C_mid).astype(jnp.bfloat16)
    w2_im2col = w2_kic.reshape(K * C_mid, C_out).astype(jnp.bfloat16)
    # TODO(synk): at real channel counts, pad K*C_in / K*C_mid / C_mid / C_out up to
    # multiples of 256 (128 on v5e) to fill the wider v6e/v7x MXUs.

    cp_kwargs = dict(dimension_semantics=("parallel",))
    if vmem_limit is not None:
        cp_kwargs["vmem_limit_bytes"] = int(vmem_limit)

    # Grid-invariant operands (constant index maps): single-buffer them.
    def wspec(shape):
        return pl.BlockSpec(shape, lambda n: (0, 0),
                            pipeline_mode=pl.Buffered(buffer_count=1))

    return pl.pallas_call(
        _cnn2_kernel,
        out_shape=jax.ShapeDtypeStruct((N, C_out, T), out_dtype),
        grid_spec=pltpu.PrefetchScalarGridSpec(
            num_scalar_prefetch=0,
            grid=(N // Bt,),
            in_specs=[
                pl.BlockSpec((Bt, C_in, T), lambda n: (n, 0, 0)),
                wspec((K * C_in, C_mid)),
                wspec((K * C_mid, C_out)),
                wspec((2, C_mid)),
                wspec((2, C_out)),
            ],
            out_specs=pl.BlockSpec((Bt, C_out, T), lambda n: (n, 0, 0)),
            scratch_shapes=[
                pltpu.VMEM((Bt, T, K * C_in), jnp.bfloat16),
                pltpu.VMEM((Bt, T, K * C_mid), jnp.bfloat16),
            ]),
        compiler_params=pltpu.CompilerParams(**cp_kwargs),
    )(x_bf16, w1_im2col, w2_im2col, bn1_ss, bn2_ss)


def _fold_bn(gamma, beta, mean, var, eps=1e-5):
    scale = gamma / jnp.sqrt(var + eps)
    shift = beta - mean * scale
    return jnp.stack([scale, shift], axis=0)  # (2, C)


def _reference_forward(x, w1_oik, w2_oik, bn1_params, bn2_params, eps=1e-5):
    """Pure-JAX f32 reference mirroring the PyTorch module (eval mode)."""
    def bn(y, g, b, m, v):
        return (y - m[None, :, None]) / jnp.sqrt(v + eps)[None, :, None] \
            * g[None, :, None] + b[None, :, None]

    y = lax.conv_general_dilated(x, w1_oik, window_strides=(1,),
                                 padding=[(1, 1)],
                                 dimension_numbers=('NCH', 'OIH', 'NCH'))
    y = jnp.maximum(bn(y, *bn1_params), 0.0)
    y = lax.conv_general_dilated(y, w2_oik, window_strides=(1,),
                                 padding=[(1, 1)],
                                 dimension_numbers=('NCH', 'OIH', 'NCH'))
    y = jnp.maximum(bn(y, *bn2_params), 0.0)
    return y


if __name__ == "__main__":
    # Small shapes consistent with the module: Conv1d over (N, C, T).
    N, C_IN, C_MID, C_OUT, T, K = 2, 4, 8, 16, 16, 3
    EPS = 1e-5

    key = jax.random.PRNGKey(0)
    ks = jax.random.split(key, 11)

    # Deterministic synthetic parameters (PyTorch weight layout: (C_out, C_in, K)).
    w1_torch = 0.1 * jax.random.normal(ks[0], (C_MID, C_IN, K), jnp.float32)
    w2_torch = 0.1 * jax.random.normal(ks[1], (C_OUT, C_MID, K), jnp.float32)

    g1 = 1.0 + 0.1 * jax.random.normal(ks[2], (C_MID,), jnp.float32)
    b1 = 0.1 * jax.random.normal(ks[3], (C_MID,), jnp.float32)
    m1 = 0.05 * jax.random.normal(ks[4], (C_MID,), jnp.float32)
    v1 = jax.random.uniform(ks[5], (C_MID,), jnp.float32, 0.5, 1.5)

    g2 = 1.0 + 0.1 * jax.random.normal(ks[6], (C_OUT,), jnp.float32)
    b2 = 0.1 * jax.random.normal(ks[7], (C_OUT,), jnp.float32)
    m2 = 0.05 * jax.random.normal(ks[8], (C_OUT,), jnp.float32)
    v2 = jax.random.uniform(ks[9], (C_OUT,), jnp.float32, 0.5, 1.5)

    x = jax.random.normal(ks[10], (N, C_IN, T), jnp.float32)

    # Kernel-side weight layout: (K, C_in, C_out) -> im2col (K*C_in, C_out), so
    # slab[:, k*C_in+ci] lines up with w[k*C_in+ci, co] = w_torch[co, ci, k].
    w1_k = jnp.transpose(w1_torch, (2, 1, 0))
    w2_k = jnp.transpose(w2_torch, (2, 1, 0))
    bn1_ss = _fold_bn(g1, b1, m1, v1, EPS)
    bn2_ss = _fold_bn(g2, b2, m2, v2, EPS)

    out = simple_cnn2layer_forward(x, w1_k, w2_k, bn1_ss, bn2_ss, padding=1)
    out = jax.block_until_ready(out)

    ref = _reference_forward(x, w1_torch, w2_torch,
                             (g1, b1, m1, v1), (g2, b2, m2, v2), EPS)
    ref = jax.block_until_ready(ref)

    assert out.shape == (N, C_OUT, T), out.shape
    # bf16 inputs/weights with f32 accumulation -> loosened tolerance vs f32 ref.
    if not bool(jnp.allclose(out, ref, atol=2e-2, rtol=2e-2)):
        raise AssertionError("Pallas kernel mismatch vs pure-JAX reference")

    print("KERNEL_OK")
</pallas_src>

<mosaic_0001>
module attributes {stable_mosaic.version = 11 : i64} {
  func.func @_cnn2_kernel(%arg0: i32, %arg1: memref<2x4x16xbf16, #tpu.memory_space<vmem>>, %arg2: memref<12x8xbf16, #tpu.memory_space<vmem>>, %arg3: memref<24x16xbf16, #tpu.memory_space<vmem>>, %arg4: memref<2x8xf32, #tpu.memory_space<vmem>>, %arg5: memref<2x16xf32, #tpu.memory_space<vmem>>, %arg6: memref<2x16x16xf32, #tpu.memory_space<vmem>>, %arg7: memref<2x16x12xbf16, #tpu.memory_space<vmem>>, %arg8: memref<2x16x24xbf16, #tpu.memory_space<vmem>>) attributes {dimension_semantics = [#tpu.dimension_semantics<parallel>], iteration_bounds = array<i64: 1>, scalar_prefetch = 0 : i64, scratch_operands = 2 : i64, tpu.core_type = #tpu.core_type<tc>, window_params = [{transform_indices = @transform_0, window_bounds = array<i64: 2, 4, 16>}, {pipeline_mode = #tpu.pipeline_mode<synchronous>, transform_indices = @transform_1, window_bounds = array<i64: 12, 8>}, {pipeline_mode = #tpu.pipeline_mode<synchronous>, transform_indices = @transform_2, window_bounds = array<i64: 24, 16>}, {pipeline_mode = #tpu.pipeline_mode<synchronous>, transform_indices = @transform_3, window_bounds = array<i64: 2, 8>}, {pipeline_mode = #tpu.pipeline_mode<synchronous>, transform_indices = @transform_4, window_bounds = array<i64: 2, 16>}, {transform_indices = @transform_5, window_bounds = array<i64: 2, 16, 16>}]} {
    %c0 = arith.constant 0 : index
    %c0_0 = arith.constant 0 : index
    %c0_1 = arith.constant 0 : index
    %0 = vector.load %arg1[%c0, %c0_0, %c0_1] : memref<2x4x16xbf16, #tpu.memory_space<vmem>>, vector<2x4x16xbf16>
    %1 = arith.extf %0 : vector<2x4x16xbf16> to vector<2x4x16xf32>
    %2 = tpu.transpose %1, [0, 2, 1] : vector<2x4x16xf32> -> vector<2x16x4xf32>
    %cst = arith.constant 0.000000e+00 : bf16
    %3 = vector.broadcast %cst : bf16 to vector<2x1x4xbf16>
    %c0_2 = arith.constant 0 : index
    %c0_3 = arith.constant 0 : index
    %c0_4 = arith.constant 0 : index
    %4 = vector.load %arg7[%c0_2, %c0_3, %c0_4] : memref<2x16x12xbf16, #tpu.memory_space<vmem>>, vector<2x1x4xbf16>
    tpu.vector_store %arg7[%c0_2, %c0_3, %c0_4], %3 {strides = array<i32>} : memref<2x16x12xbf16, #tpu.memory_space<vmem>>, vector<2x1x4xbf16>,
    %5 = vector.extract_strided_slice %2 {offsets = [0, 0, 0], sizes = [2, 15, 4], strides = [1, 1, 1]} : vector<2x16x4xf32> to vector<2x15x4xf32>
    %6 = arith.truncf %5 : vector<2x15x4xf32> to vector<2x15x4xbf16>
    %c0_5 = arith.constant 0 : index
    %c1 = arith.constant 1 : index
    %c0_6 = arith.constant 0 : index
    %7 = vector.load %arg7[%c0_5, %c1, %c0_6] : memref<2x16x12xbf16, #tpu.memory_space<vmem>>, vector<2x15x4xbf16>
    tpu.vector_store %arg7[%c0_5, %c1, %c0_6], %6 {strides = array<i32>} : memref<2x16x12xbf16, #tpu.memory_space<vmem>>, vector<2x15x4xbf16>,
    %8 = arith.truncf %2 : vector<2x16x4xf32> to vector<2x16x4xbf16>
    %c0_7 = arith.constant 0 : index
    %c0_8 = arith.constant 0 : index
    %c4 = arith.constant 4 : index
    %9 = vector.load %arg7[%c0_7, %c0_8, %c4] : memref<2x16x12xbf16, #tpu.memory_space<vmem>>, vector<2x16x4xbf16>
    tpu.vector_store %arg7[%c0_7, %c0_8, %c4], %8 {strides = array<i32>} : memref<2x16x12xbf16, #tpu.memory_space<vmem>>, vector<2x16x4xbf16>,
    %10 = vector.extract_strided_slice %2 {offsets = [0, 1, 0], sizes = [2, 15, 4], strides = [1, 1, 1]} : vector<2x16x4xf32> to vector<2x15x4xf32>
    %11 = arith.truncf %10 : vector<2x15x4xf32> to vector<2x15x4xbf16>
    %c0_9 = arith.constant 0 : index
    %c0_10 = arith.constant 0 : index
    %c8 = arith.constant 8 : index
    %12 = vector.load %arg7[%c0_9, %c0_10, %c8] : memref<2x16x12xbf16, #tpu.memory_space<vmem>>, vector<2x15x4xbf16>
    tpu.vector_store %arg7[%c0_9, %c0_10, %c8], %11 {strides = array<i32>} : memref<2x16x12xbf16, #tpu.memory_space<vmem>>, vector<2x15x4xbf16>,
    %cst_11 = arith.constant 0.000000e+00 : bf16
    %13 = vector.broadcast %cst_11 : bf16 to vector<2x1x4xbf16>
    %c0_12 = arith.constant 0 : index
    %c15 = arith.constant 15 : index
    %c8_13 = arith.constant 8 : index
    %14 = vector.load %arg7[%c0_12, %c15, %c8_13] : memref<2x16x12xbf16, #tpu.memory_space<vmem>>, vector<2x1x4xbf16>
    tpu.vector_store %arg7[%c0_12, %c15, %c8_13], %13 {strides = array<i32>} : memref<2x16x12xbf16, #tpu.memory_space<vmem>>, vector<2x1x4xbf16>,
    %c0_14 = arith.constant 0 : index
    %c0_15 = arith.constant 0 : index
    %c0_16 = arith.constant 0 : index
    %15 = vector.load %arg7[%c0_14, %c0_15, %c0_16] : memref<2x16x12xbf16, #tpu.memory_space<vmem>>, vector<2x16x12xbf16>
    %16 = vector.shape_cast %15 : vector<2x16x12xbf16> to vector<32x12xbf16>
    %c0_17 = arith.constant 0 : index
    %c0_18 = arith.constant 0 : index
    %17 = vector.load %arg2[%c0_17, %c0_18] : memref<12x8xbf16, #tpu.memory_space<vmem>>, vector<12x8xbf16>
    %cst_19 = arith.constant dense<0.000000e+00> : vector<32x8xf32>
    %18 = tpu.matmul %16, %17, %cst_19 {dimension_numbers = #tpu.dot_dimension_numbers<[1], [0], [0], [1], [0, 0, 1, 1], [], []>} : vector<32x12xbf16>, vector<12x8xbf16>, vector<32x8xf32> -> vector<32x8xf32>
    %c0_20 = arith.constant 0 : index
    %c0_21 = arith.constant 0 : index
    %19 = vector.load %arg4[%c0_20, %c0_21] : memref<2x8xf32, #tpu.memory_space<vmem>>, vector<1x8xf32>
    %20 = vector.broadcast %19 : vector<1x8xf32> to vector<32x8xf32>
    %21 = arith.mulf %18, %20 : vector<32x8xf32>
    %c1_22 = arith.constant 1 : index
    %c0_23 = arith.constant 0 : index
    %22 = vector.load %arg4[%c1_22, %c0_23] : memref<2x8xf32, #tpu.memory_space<vmem>>, vector<1x8xf32>
    %23 = vector.broadcast %22 : vector<1x8xf32> to vector<32x8xf32>
    %24 = arith.addf %21, %23 : vector<32x8xf32>
    %cst_24 = arith.constant 0.000000e+00 : f32
    %25 = vector.broadcast %cst_24 : f32 to vector<32x8xf32>
    %26 = arith.maximumf %24, %25 : vector<32x8xf32>
    %27 = vector.shape_cast %26 : vector<32x8xf32> to vector<2x16x8xf32>
    %cst_25 = arith.constant 0.000000e+00 : bf16
    %28 = vector.broadcast %cst_25 : bf16 to vector<2x1x8xbf16>
    %c0_26 = arith.constant 0 : index
    %c0_27 = arith.constant 0 : index
    %c0_28 = arith.constant 0 : index
    %29 = vector.load %arg8[%c0_26, %c0_27, %c0_28] : memref<2x16x24xbf16, #tpu.memory_space<vmem>>, vector<2x1x8xbf16>
    tpu.vector_store %arg8[%c0_26, %c0_27, %c0_28], %28 {strides = array<i32>} : memref<2x16x24xbf16, #tpu.memory_space<vmem>>, vector<2x1x8xbf16>,
    %30 = vector.extract_strided_slice %27 {offsets = [0, 0, 0], sizes = [2, 15, 8], strides = [1, 1, 1]} : vector<2x16x8xf32> to vector<2x15x8xf32>
    %31 = arith.truncf %30 : vector<2x15x8xf32> to vector<2x15x8xbf16>
    %c0_29 = arith.constant 0 : index
    %c1_30 = arith.constant 1 : index
    %c0_31 = arith.constant 0 : index
    %32 = vector.load %arg8[%c0_29, %c1_30, %c0_31] : memref<2x16x24xbf16, #tpu.memory_space<vmem>>, vector<2x15x8xbf16>
    tpu.vector_store %arg8[%c0_29, %c1_30, %c0_31], %31 {strides = array<i32>} : memref<2x16x24xbf16, #tpu.memory_space<vmem>>, vector<2x15x8xbf16>,
    %33 = arith.truncf %27 : vector<2x16x8xf32> to vector<2x16x8xbf16>
    %c0_32 = arith.constant 0 : index
    %c0_33 = arith.constant 0 : index
    %c8_34 = arith.constant 8 : index
    %34 = vector.load %arg8[%c0_32, %c0_33, %c8_34] : memref<2x16x24xbf16, #tpu.memory_space<vmem>>, vector<2x16x8xbf16>
    tpu.vector_store %arg8[%c0_32, %c0_33, %c8_34], %33 {strides = array<i32>} : memref<2x16x24xbf16, #tpu.memory_space<vmem>>, vector<2x16x8xbf16>,
    %35 = vector.extract_strided_slice %27 {offsets = [0, 1, 0], sizes = [2, 15, 8], strides = [1, 1, 1]} : vector<2x16x8xf32> to vector<2x15x8xf32>
    %36 = arith.truncf %35 : vector<2x15x8xf32> to vector<2x15x8xbf16>
    %c0_35 = arith.constant 0 : index
    %c0_36 = arith.constant 0 : index
    %c16 = arith.constant 16 : index
    %37 = vector.load %arg8[%c0_35, %c0_36, %c16] : memref<2x16x24xbf16, #tpu.memory_space<vmem>>, vector<2x15x8xbf16>
    tpu.vector_store %arg8[%c0_35, %c0_36, %c16], %36 {strides = array<i32>} : memref<2x16x24xbf16, #tpu.memory_space<vmem>>, vector<2x15x8xbf16>,
    %cst_37 = arith.constant 0.000000e+00 : bf16
    %38 = vector.broadcast %cst_37 : bf16 to vector<2x1x8xbf16>
    %c0_38 = arith.constant 0 : index
    %c15_39 = arith.constant 15 : index
    %c16_40 = arith.constant 16 : index
    %39 = vector.load %arg8[%c0_38, %c15_39, %c16_40] : memref<2x16x24xbf16, #tpu.memory_space<vmem>>, vector<2x1x8xbf16>
    tpu.vector_store %arg8[%c0_38, %c15_39, %c16_40], %38 {strides = array<i32>} : memref<2x16x24xbf16, #tpu.memory_space<vmem>>, vector<2x1x8xbf16>,
    %c0_41 = arith.constant 0 : index
    %c0_42 = arith.constant 0 : index
    %c0_43 = arith.constant 0 : index
    %40 = vector.load %arg8[%c0_41, %c0_42, %c0_43] : memref<2x16x24xbf16, #tpu.memory_space<vmem>>, vector<2x16x24xbf16>
    %41 = vector.shape_cast %40 : vector<2x16x24xbf16> to vector<32x24xbf16>
    %c0_44 = arith.constant 0 : index
    %c0_45 = arith.constant 0 : index
    %42 = vector.load %arg3[%c0_44, %c0_45] : memref<24x16xbf16, #tpu.memory_space<vmem>>, vector<24x16xbf16>
    %cst_46 = arith.constant dense<0.000000e+00> : vector<32x16xf32>
    %43 = tpu.matmul %41, %42, %cst_46 {dimension_numbers = #tpu.dot_dimension_numbers<[1], [0], [0], [1], [0, 0, 1, 1], [], []>} : vector<32x24xbf16>, vector<24x16xbf16>, vector<32x16xf32> -> vector<32x16xf32>
    %c0_47 = arith.constant 0 : index
    %c0_48 = arith.constant 0 : index
    %44 = vector.load %arg5[%c0_47, %c0_48] : memref<2x16xf32, #tpu.memory_space<vmem>>, vector<1x16xf32>
    %45 = vector.broadcast %44 : vector<1x16xf32> to vector<32x16xf32>
    %46 = arith.mulf %43, %45 : vector<32x16xf32>
    %c1_49 = arith.constant 1 : index
    %c0_50 = arith.constant 0 : index
    %47 = vector.load %arg5[%c1_49, %c0_50] : memref<2x16xf32, #tpu.memory_space<vmem>>, vector<1x16xf32>
    %48 = vector.broadcast %47 : vector<1x16xf32> to vector<32x16xf32>
    %49 = arith.addf %46, %48 : vector<32x16xf32>
    %cst_51 = arith.constant 0.000000e+00 : f32
    %50 = vector.broadcast %cst_51 : f32 to vector<32x16xf32>
    %51 = arith.maximumf %49, %50 : vector<32x16xf32>
    %52 = vector.shape_cast %51 : vector<32x16xf32> to vector<2x16x16xf32>
    %53 = tpu.transpose %52, [0, 2, 1] : vector<2x16x16xf32> -> vector<2x16x16xf32>
    %c0_52 = arith.constant 0 : index
    %c0_53 = arith.constant 0 : index
    %c0_54 = arith.constant 0 : index
    %54 = vector.load %arg6[%c0_52, %c0_53, %c0_54] : memref<2x16x16xf32, #tpu.memory_space<vmem>>, vector<2x16x16xf32>
    tpu.vector_store %arg6[%c0_52, %c0_53, %c0_54], %53 {strides = array<i32>} : memref<2x16x16xf32, #tpu.memory_space<vmem>>, vector<2x16x16xf32>,
    return
  }
  func.func @transform_0(%arg0: i32) -> (i32, i32, i32) {
    %c0_i32 = arith.constant 0 : i32
    %c0_i32_0 = arith.constant 0 : i32
    %c0_i32_1 = arith.constant 0 : i32
    return %arg0, %c0_i32, %c0_i32_0 : i32, i32, i32
  }
  func.func @transform_1(%arg0: i32) -> (i32, i32) {
    %c0_i32 = arith.constant 0 : i32
    %c0_i32_0 = arith.constant 0 : i32
    %c0_i32_1 = arith.constant 0 : i32
    return %c0_i32, %c0_i32_0 : i32, i32
  }
  func.func @transform_2(%arg0: i32) -> (i32, i32) {
    %c0_i32 = arith.constant 0 : i32
    %c0_i32_0 = arith.constant 0 : i32
    %c0_i32_1 = arith.constant 0 : i32
    return %c0_i32, %c0_i32_0 : i32, i32
  }
  func.func @transform_3(%arg0: i32) -> (i32, i32) {
    %c0_i32 = arith.constant 0 : i32
    %c0_i32_0 = arith.constant 0 : i32
    %c0_i32_1 = arith.constant 0 : i32
    return %c0_i32, %c0_i32_0 : i32, i32
  }
  func.func @transform_4(%arg0: i32) -> (i32, i32) {
    %c0_i32 = arith.constant 0 : i32
    %c0_i32_0 = arith.constant 0 : i32
    %c0_i32_1 = arith.constant 0 : i32
    return %c0_i32, %c0_i32_0 : i32, i32
  }
  func.func @transform_5(%arg0: i32) -> (i32, i32, i32) {
    %c0_i32 = arith.constant 0 : i32
    %c0_i32_0 = arith.constant 0 : i32
    %c0_i32_1 = arith.constant 0 : i32
    return %arg0, %c0_i32, %c0_i32_0 : i32, i32, i32
  }
}

</mosaic_0001>

<llo_original>
// kernel: tpu_custom_call.1
$region0: #{tpu_custom_call.1}
  #allocation0 [shape = 'u32[]', space=smem, size = 0x4, offset = 0x4, fixed_abs, tag = 'smem constant byte address 0x4 - core index']
  #allocation1 [shape = 'u32[144,128]{1,0:T(1,128)}', space=vmem, size = 0x12000, scoped, tag = 'internal scratch']
  #allocation2 [shape = 'bf16[2,16,12]{2,1,0:T(16,128)(2,1)}', space=vmem, size = 0x2000, scoped, tag = 'scratch operand']
  #allocation3 [shape = 'bf16[2,16,24]{2,1,0:T(16,128)(2,1)}', space=vmem, size = 0x2000, scoped, tag = 'scratch operand']
  %s0 = inlined_call_operand.vmem [shape: bf16[2,4,16], index: 0, kind: input, shape index: {}]
  %s1 = inlined_call_operand.vmem [shape: bf16[12,8], index: 1, kind: input, shape index: {}]
  %s2 = inlined_call_operand.vmem [shape: bf16[24,16], index: 2, kind: input, shape index: {}]
  %s3 = inlined_call_operand.vmem [shape: f32[2,8], index: 3, kind: input, shape index: {}]
  %s4 = inlined_call_operand.vmem [shape: f32[2,16], index: 4, kind: input, shape index: {}]
  %s5 = inlined_call_operand.hbm [shape: f32[2,16,16], index: 5, kind: output, shape index: {}]
  %s6 = sld [smem:[#allocation0]]
  $region30: #{tpu_custom_call.1} parent=0
    _
  %s8 = ssub.s32 1, %s6
  %s9 = scalar_select 0, %s8, %s6
  $region1: #{tpu_custom_call.1} parent=0
    #allocation4 [shape = 'u8[16384]{0}', space=vmem, size = 0x4000, scoped, tag = 'output window, operand 0, single buffered']
    #allocation5 [shape = 's32[1]{0}', space=sflag, size = 0x4, scoped, tag = 'scoped memory for tpu_custom_call.1']
    %10 = vsyncpa [#allocation5], 0
    // Predicated region
    $region2: #{tpu_custom_call.1} parent=1 // pred_check
      _
    $region3: #{tpu_custom_call.1} parent=1 // pred_check_branch
      %12 = sbr.rel (0) target = $region5
    $region4: #{tpu_custom_call.1} parent=1 // pred_region
      _
    $region5: #{tpu_custom_call.1} parent=1 // pred_fallthru
      _
    // Predicated region
    $region6: #{tpu_custom_call.1} parent=1 // pred_check
      _
    $region7: #{tpu_custom_call.1} parent=1 // pred_check_branch
      %14 = sbr.rel (0) target = $region9
    $region8: #{tpu_custom_call.1} parent=1 // pred_region
      _
    $region9: #{tpu_custom_call.1} parent=1 // pred_fallthru
      _
    // Predicated region
    $region10: #{tpu_custom_call.1} parent=1 // pred_check
      _
    $region11: #{tpu_custom_call.1} parent=1 // pred_check_branch
      %16 = sbr.rel (0) target = $region13
    $region12: #{tpu_custom_call.1} parent=1 // pred_region
      _
    $region13: #{tpu_custom_call.1} parent=1 // pred_fallthru
      _
    // Predicated region
    $region14: #{tpu_custom_call.1} parent=1 // pred_check
      _
    $region15: #{tpu_custom_call.1} parent=1 // pred_check_branch
      %18 = sbr.rel (0) target = $region17
    $region16: #{tpu_custom_call.1} parent=1 // pred_region
      _
    $region17: #{tpu_custom_call.1} parent=1 // pred_fallthru
      _
    // Predicated region
    $region18: #{tpu_custom_call.1} parent=1 // pred_check
      _
    $region19: #{tpu_custom_call.1} parent=1 // pred_check_branch
      %20 = sbr.rel (0) target = $region21
    $region20: #{tpu_custom_call.1} parent=1 // pred_region
      _
    $region21: #{tpu_custom_call.1} parent=1 // pred_fallthru
      _
    %v22 = vld [vmem:[%s0] sm:$0x3]
    %v23 = vld [vmem:[%s0 + $0x2] sm:$0x3]
    %v24 = vunpack.c.l.bf16 %v22
    %v25 = vunpack.c.l.bf16 %v23
    %26 = vxpose.xlu0.b32.start [1/16] %v24, 128
    %27 = vxpose.xlu0.b32.cont [2/16] 0.0, 128
    %28 = vxpose.xlu0.b32.cont [3/16] 0.0, 128
    %29 = vxpose.xlu0.b32.cont [4/16] 0.0, 128
    %30 = vxpose.xlu0.b32.cont [5/16] 0.0, 128
    %31 = vxpose.xlu0.b32.cont [6/16] 0.0, 128
    %32 = vxpose.xlu0.b32.cont [7/16] 0.0, 128
    %33 = vxpose.xlu0.b32.cont [8/16] 0.0, 128
    %34 = vxpose.xlu0.b32.cont [9/16] 0.0, 128
    %35 = vxpose.xlu0.b32.cont [10/16] 0.0, 128
    %36 = vxpose.xlu0.b32.cont [11/16] 0.0, 128
    %37 = vxpose.xlu0.b32.cont [12/16] 0.0, 128
    %38 = vxpose.xlu0.b32.cont [13/16] 0.0, 128
    %39 = vxpose.xlu0.b32.cont [14/16] 0.0, 128
    %40 = vxpose.xlu0.b32.cont [15/16] 0.0, 128
    %41 = vxpose.xlu0.b32.end [16/16] 0.0, 128
    %v42 = vpop.trf.xlu0
    %v43 = vpop.trf.xlu0
    %v44 = vpop.trf.xlu0
    %v45 = vpop.trf.xlu0
    %v46 = vpop.trf.xlu0
    %v47 = vpop.trf.xlu0
    %v48 = vpop.trf.xlu0
    %v49 = vpop.trf.xlu0
    %v50 = vpop.trf.xlu0
    %v51 = vpop.trf.xlu0
    %v52 = vpop.trf.xlu0
    %v53 = vpop.trf.xlu0
    %v54 = vpop.trf.xlu0
    %v55 = vpop.trf.xlu0
    %v56 = vpop.trf.xlu0
    %v57 = vpop.trf.xlu0
    %58 = vxpose.xlu0.b32.start [1/16] %v25, 128
    %59 = vxpose.xlu0.b32.cont [2/16] 0.0, 128
    %60 = vxpose.xlu0.b32.cont [3/16] 0.0, 128
    %61 = vxpose.xlu0.b32.cont [4/16] 0.0, 128
    %62 = vxpose.xlu0.b32.cont [5/16] 0.0, 128
    %63 = vxpose.xlu0.b32.cont [6/16] 0.0, 128
    %64 = vxpose.xlu0.b32.cont [7/16] 0.0, 128
    %65 = vxpose.xlu0.b32.cont [8/16] 0.0, 128
    %66 = vxpose.xlu0.b32.cont [9/16] 0.0, 128
    %67 = vxpose.xlu0.b32.cont [10/16] 0.0, 128
    %68 = vxpose.xlu0.b32.cont [11/16] 0.0, 128
    %69 = vxpose.xlu0.b32.cont [12/16] 0.0, 128
    %70 = vxpose.xlu0.b32.cont [13/16] 0.0, 128
    %71 = vxpose.xlu0.b32.cont [14/16] 0.0, 128
    %72 = vxpose.xlu0.b32.cont [15/16] 0.0, 128
    %73 = vxpose.xlu0.b32.end [16/16] 0.0, 128
    %v74 = vpop.trf.xlu0
    %v75 = vpop.trf.xlu0
    %v76 = vpop.trf.xlu0
    %v77 = vpop.trf.xlu0
    %v78 = vpop.trf.xlu0
    %v79 = vpop.trf.xlu0
    %v80 = vpop.trf.xlu0
    %v81 = vpop.trf.xlu0
    %v82 = vpop.trf.xlu0
    %v83 = vpop.trf.xlu0
    %v84 = vpop.trf.xlu0
    %v85 = vpop.trf.xlu0
    %v86 = vpop.trf.xlu0
    %v87 = vpop.trf.xlu0
    %v88 = vpop.trf.xlu0
    %v89 = vpop.trf.xlu0
    %vm90 = vcmask 24576
    %vm91 = vsmask.f32 256
    %vm92 = vmand %vm90, %vm91
    %v93 = vld [vmem:[#allocation2] sm:$0x1]
    %v94 = vsel %vm92, 0, %v93
    %95 = vst [vmem:[#allocation2] sm:$0x1] %v94
    %v96 = vld [vmem:[#allocation2 + $0x8] sm:$0x1]
    %v97 = vsel %vm92, 0, %v96
    %98 = vst [vmem:[#allocation2 + $0x8] sm:$0x1] %v97
    %v99 = vpack.c.bf16 %v43, %v42
    %v100 = vpack.c.bf16 %v75, %v74
    %v102 = vshrl.u32 %v99, 16
    %v104 = vrot.slane %v102, 7
    %v105 = vshll.u32 %v99, 16
    %v107 = vor.u32 %v104, %v105
    %v109 = vshrl.u32 %v100, 16
    %v111 = vrot.slane %v109, 7
    %v112 = vshll.u32 %v100, 16
    %v114 = vor.u32 %v111, %v112
    %vm117 = vcmask 31744
    %vm118 = vsmask.f32 7938
    %vm119 = vmand %vm117, %vm118
    %v120 = vld [vmem:[#allocation2] sm:$0xff]
    %v121 = vsel %vm119, %v107, %v120
    %122 = vst [vmem:[#allocation2] sm:$0xff] %v121
    %v123 = vld [vmem:[#allocation2 + $0x8] sm:$0xff]
    %v124 = vsel %vm119, %v114, %v123
    %125 = vst [vmem:[#allocation2 + $0x8] sm:$0xff] %v124
    %128 = vrot.lane.b32.xlu0 %v99, 4
    %v129 = vpop.permute.xlu0 %128
    %130 = vrot.lane.b32.xlu0 %v100, 4
    %v131 = vpop.permute.xlu0 %130
    %vm134 = vcmask 64544
    %135 = vst.msk [vmem:[#allocation2] sm:$0xff] %vm134, %v129
    %136 = vst.msk [vmem:[#allocation2 + $0x8] sm:$0xff] %vm134, %v131
    %v137 = vrot.slane %v105, 1
    %v138 = vor.u32 %v102, %v137
    %v139 = vrot.slane %v112, 1
    %v140 = vor.u32 %v109, %v139
    %141 = vrot.lane.b32.xlu0 %v138, 8
    %v142 = vpop.permute.xlu0 %141
    %143 = vrot.lane.b32.xlu0 %v140, 8
    %v144 = vpop.permute.xlu0 %143
    %vm147 = vcmask 97344
    %vm148 = vsmask.f32 7424
    %vm149 = vmand %vm147, %vm148
    %v150 = vld [vmem:[#allocation2] sm:$0xff]
    %v151 = vsel %vm149, %v142, %v150
    %152 = vst [vmem:[#allocation2] sm:$0xff] %v151
    %v153 = vld [vmem:[#allocation2 + $0x8] sm:$0xff]
    %v154 = vsel %vm149, %v144, %v153
    %155 = vst [vmem:[#allocation2 + $0x8] sm:$0xff] %v154
    %vm156 = vcmask 97351
    %vm157 = vsmask.f32 7966
    %vm158 = vmand %vm156, %vm157
    %v159 = vld [vmem:[#allocation2] sm:$0x80]
    %v160 = vsel %vm158, 0, %v159
    %161 = vst [vmem:[#allocation2] sm:$0x80] %v160
    %v162 = vld [vmem:[#allocation2 + $0x8] sm:$0x80]
    %v163 = vsel %vm158, 0, %v162
    %164 = vst [vmem:[#allocation2 + $0x8] sm:$0x80] %v163
    %v165 = vld [vmem:[#allocation2] sm:$0xff]
    %v166 = vld [vmem:[#allocation2 + $0x8] sm:$0xff]
    %v167 = vld [vmem:[%s1] sm:$0xf]
    %v168 = vld [vmem:[%s1 + $0x4] sm:$0x3]
    %v171 = vunpack.c.l.b16 %v167
    %v172 = vunpack.c.l.b16 %v168
    %v173 = vpack.c.b16 %v172, %v171
    %vm174 = vcmask 97280
    %v176 = vsel %vm174, %v165, 0
    %v179 = vsel %vm174, %v166, 0
    %vm181 = vcmask 1045504
    %v183 = vsel %vm181, %v173, 0
    %185 = vmatprep.subr.bf16.mxu0 0
    %186 = vmatpush1.bf16.msra.mxu0 %v183
    %187 = vmatprep.subr.bf16.mxu0 0
    %188 = vmatpush1.bf16.msra.mxu0 0
    %189 = vmatprep.subr.bf16.mxu0 0
    %190 = vmatpush1.bf16.msra.mxu0 0
    %191 = vmatprep.subr.bf16.mxu0 0
    %192 = vmatpush1.bf16.msra.mxu0 0
    %193 = vmatprep.subr.bf16.mxu0 0
    %194 = vmatpush1.bf16.msra.mxu0 0
    %195 = vmatprep.subr.bf16.mxu0 0
    %196 = vmatpush1.bf16.msra.mxu0 0
    %197 = vmatprep.subr.bf16.mxu0 0
    %198 = vmatpush1.bf16.msra.mxu0 0
    %199 = vmatprep.subr.bf16.mxu0 0
    %200 = vmatpush1.bf16.msra.mxu0 0
    %201 = vmatprep.subr.bf16.mxu0 0
    %202 = vmatpush1.bf16.msra.mxu0 0
    %203 = vmatprep.subr.bf16.mxu0 0
    %204 = vmatpush1.bf16.msra.mxu0 0
    %205 = vmatprep.subr.bf16.mxu0 0
    %206 = vmatpush1.bf16.msra.mxu0 0
    %207 = vmatprep.subr.bf16.mxu0 0
    %208 = vmatpush1.bf16.msra.mxu0 0
    %209 = vmatprep.subr.bf16.mxu0 0
    %210 = vmatpush1.bf16.msra.mxu0 0
    %211 = vmatprep.subr.bf16.mxu0 0
    %212 = vmatpush1.bf16.msra.mxu0 0
    %213 = vmatprep.subr.bf16.mxu0 0
    %214 = vmatpush1.bf16.msra.mxu0 0
    %215 = vmatprep.subr.bf16.mxu0 0
    %216 = vmatpush1.bf16.msra.mxu0 0
    %217 = vmatprep.mubr.bf16.mxu0 0
    %218 = vmatmul.mubr.bf16.gmra.mrb[0].mxu0 %v176
    %v219 = vpop.f32.mrb[0].mxu0
    %v220 = vadd.f32 0.0, %v219
    %v221 = vpop.f32.mrb[0].mxu0
    %v222 = vpop.f32.mrb[0].mxu0
    %v223 = vadd.f32 0.0, %v222
    %v224 = vpop.f32.mrb[0].mxu0
    %225 = vmatprep.mubr.bf16.mxu0 0
    %226 = vmatmul.mubr.bf16.gmra.mrb[0].mxu0 %v179
    %v227 = vpop.f32.mrb[0].mxu0
    %v228 = vadd.f32 0.0, %v227
    %v229 = vpop.f32.mrb[0].mxu0
    %v230 = vpop.f32.mrb[0].mxu0
    %v231 = vadd.f32 0.0, %v230
    %v232 = vpop.f32.mrb[0].mxu0
    %233 = vdwg.mxu0
    %v234 = vld [vmem:[%s3] sm:$0x1]
    %v235 = vlaneseq
    %v236 = vshrl.u32 %v235, 7
    %v237 = vsub.s32 0, %v236
    %v238 = vrot.slane %v234, %v237
    %v239 = vmul.f32 %v220, %v238
    %v240 = vmul.f32 %v223, %v238
    %v241 = vmul.f32 %v228, %v238
    %v242 = vmul.f32 %v231, %v238
    %v243 = vld [vmem:[%s3 + $0x1] sm:$0x1]
    %v244 = vlaneseq
    %v245 = vshrl.u32 %v244, 7
    %v246 = vsub.s32 0, %v245
    %v247 = vrot.slane %v243, %v246
    %v248 = vadd.f32 %v239, %v247
    %v249 = vadd.f32 %v240, %v247
    %v250 = vadd.f32 %v241, %v247
    %v251 = vadd.f32 %v242, %v247
    %v252 = vmax.f32 %v248, 0.0
    %v253 = vmax.f32 %v249, 0.0
    %v254 = vmax.f32 %v250, 0.0
    %v255 = vmax.f32 %v251, 0.0
    %vm256 = vcmask 57344
    %vm257 = vmand %vm256, %vm91
    %v258 = vld [vmem:[#allocation3] sm:$0x1]
    %v259 = vsel %vm257, 0, %v258
    %260 = vst [vmem:[#allocation3] sm:$0x1] %v259
    %v261 = vld [vmem:[#allocation3 + $0x8] sm:$0x1]
    %v262 = vsel %vm257, 0, %v261
    %263 = vst [vmem:[#allocation3 + $0x8] sm:$0x1] %v262
    %v264 = vpack.c.bf16 %v253, %v252
    %v265 = vpack.c.bf16 %v255, %v254
    %v267 = vshrl.u32 %v264, 16
    %v269 = vrot.slane %v267, 7
    %v270 = vshll.u32 %v264, 16
    %v272 = vor.u32 %v269, %v270
    %v274 = vshrl.u32 %v265, 16
    %v276 = vrot.slane %v274, 7
    %v277 = vshll.u32 %v265, 16
    %v279 = vor.u32 %v276, %v277
    %vm282 = vcmask 64512
    %vm283 = vmand %vm282, %vm118
    %v284 = vld [vmem:[#allocation3] sm:$0xff]
    %v285 = vsel %vm283, %v272, %v284
    %286 = vst [vmem:[#allocation3] sm:$0xff] %v285
    %v287 = vld [vmem:[#allocation3 + $0x8] sm:$0xff]
    %v288 = vsel %vm283, %v279, %v287
    %289 = vst [vmem:[#allocation3 + $0x8] sm:$0xff] %v288
    %292 = vrot.lane.b32.xlu0 %v264, 8
    %v293 = vpop.permute.xlu0 %292
    %294 = vrot.lane.b32.xlu0 %v265, 8
    %v295 = vpop.permute.xlu0 %294
    %vm298 = vcmask 130112
    %299 = vst.msk [vmem:[#allocation3] sm:$0xff] %vm298, %v293
    %300 = vst.msk [vmem:[#allocation3 + $0x8] sm:$0xff] %vm298, %v295
    %v301 = vrot.slane %v270, 1
    %v302 = vor.u32 %v267, %v301
    %v303 = vrot.slane %v277, 1
    %v304 = vor.u32 %v274, %v303
    %305 = vrot.lane.b32.xlu0 %v302, 16
    %v306 = vpop.permute.xlu0 %305
    %307 = vrot.lane.b32.xlu0 %v304, 16
    %v308 = vpop.permute.xlu0 %307
    %vm311 = vcmask 195712
    %vm312 = vmand %vm311, %vm148
    %v313 = vld [vmem:[#allocation3] sm:$0xff]
    %v314 = vsel %vm312, %v306, %v313
    %315 = vst [vmem:[#allocation3] sm:$0xff] %v314
    %v316 = vld [vmem:[#allocation3 + $0x8] sm:$0xff]
    %v317 = vsel %vm312, %v308, %v316
    %318 = vst [vmem:[#allocation3 + $0x8] sm:$0xff] %v317
    %vm319 = vcmask 195719
    %vm320 = vmand %vm319, %vm157
    %v321 = vld [vmem:[#allocation3] sm:$0x80]
    %v322 = vsel %vm320, 0, %v321
    %323 = vst [vmem:[#allocation3] sm:$0x80] %v322
    %v324 = vld [vmem:[#allocation3 + $0x8] sm:$0x80]
    %v325 = vsel %vm320, 0, %v324
    %326 = vst [vmem:[#allocation3 + $0x8] sm:$0x80] %v325
    %v327 = vld [vmem:[#allocation3] sm:$0xff]
    %v328 = vld [vmem:[#allocation3 + $0x8] sm:$0xff]
    %v329 = vld [vmem:[%s2] sm:$0xf]
    %v330 = vld [vmem:[%s2 + $0x4] sm:$0xf]
    %v331 = vld [vmem:[%s2 + $0x8] sm:$0xf]
    %v335 = vunpack.c.l.b16 %v329
    %v336 = vunpack.c.l.b16 %v330
    %v337 = vunpack.c.l.b16 %v331
    %v338 = vpack.c.b16 %v336, %v335
    %v339 = vpack.c.b16 %v337, %v337
    %vm341 = vcmask 195584
    %v343 = vsel %vm341, %v327, 0
    %v346 = vsel %vm341, %v328, 0
    %vm348 = vcmask 1043456
    %v350 = vsel %vm348, %v339, 0
    %352 = vmatprep.subr.bf16.mxu0 0
    %353 = vmatpush1.bf16.msra.mxu0 %v338
    %354 = vmatprep.subr.bf16.mxu0 0
    %355 = vmatpush1.bf16.msra.mxu0 %v350
    %356 = vmatprep.subr.bf16.mxu0 0
    %357 = vmatpush1.bf16.msra.mxu0 0
    %358 = vmatprep.subr.bf16.mxu0 0
    %359 = vmatpush1.bf16.msra.mxu0 0
    %360 = vmatprep.subr.bf16.mxu0 0
    %361 = vmatpush1.bf16.msra.mxu0 0
    %362 = vmatprep.subr.bf16.mxu0 0
    %363 = vmatpush1.bf16.msra.mxu0 0
    %364 = vmatprep.subr.bf16.mxu0 0
    %365 = vmatpush1.bf16.msra.mxu0 0
    %366 = vmatprep.subr.bf16.mxu0 0
    %367 = vmatpush1.bf16.msra.mxu0 0
    %368 = vmatprep.subr.bf16.mxu0 0
    %369 = vmatpush1.bf16.msra.mxu0 0
    %370 = vmatprep.subr.bf16.mxu0 0
    %371 = vmatpush1.bf16.msra.mxu0 0
    %372 = vmatprep.subr.bf16.mxu0 0
    %373 = vmatpush1.bf16.msra.mxu0 0
    %374 = vmatprep.subr.bf16.mxu0 0
    %375 = vmatpush1.bf16.msra.mxu0 0
    %376 = vmatprep.subr.bf16.mxu0 0
    %377 = vmatpush1.bf16.msra.mxu0 0
    %378 = vmatprep.subr.bf16.mxu0 0
    %379 = vmatpush1.bf16.msra.mxu0 0
    %380 = vmatprep.subr.bf16.mxu0 0
    %381 = vmatpush1.bf16.msra.mxu0 0
    %382 = vmatprep.subr.bf16.mxu0 0
    %383 = vmatpush1.bf16.msra.mxu0 0
    %384 = vmatprep.mubr.bf16.mxu0 0
    %385 = vmatmul.mubr.bf16.gmra.mrb[0].mxu0 %v343
    %v386 = vpop.f32.mrb[0].mxu0
    %v387 = vadd.f32 0.0, %v386
    %v388 = vpop.f32.mrb[0].mxu0
    %v389 = vpop.f32.mrb[0].mxu0
    %v390 = vadd.f32 0.0, %v389
    %v391 = vpop.f32.mrb[0].mxu0
    %392 = vmatprep.mubr.bf16.mxu0 0
    %393 = vmatmul.mubr.bf16.gmra.mrb[0].mxu0 %v346
    %v394 = vpop.f32.mrb[0].mxu0
    %v395 = vadd.f32 0.0, %v394
    %v396 = vpop.f32.mrb[0].mxu0
    %v397 = vpop.f32.mrb[0].mxu0
    %v398 = vadd.f32 0.0, %v397
    %v399 = vpop.f32.mrb[0].mxu0
    %400 = vdwg.mxu0
    %v401 = vld [vmem:[%s4] sm:$0x1]
    %v402 = vlaneseq
    %v403 = vshrl.u32 %v402, 7
    %v404 = vsub.s32 0, %v403
    %v405 = vrot.slane %v401, %v404
    %v406 = vmul.f32 %v387, %v405
    %v407 = vmul.f32 %v390, %v405
    %v408 = vmul.f32 %v395, %v405
    %v409 = vmul.f32 %v398, %v405
    %v410 = vld [vmem:[%s4 + $0x1] sm:$0x1]
    %v411 = vlaneseq
    %v412 = vshrl.u32 %v411, 7
    %v413 = vsub.s32 0, %v412
    %v414 = vrot.slane %v410, %v413
    %v415 = vadd.f32 %v406, %v414
    %v416 = vadd.f32 %v407, %v414
    %v417 = vadd.f32 %v408, %v414
    %v418 = vadd.f32 %v409, %v414
    %v419 = vmax.f32 %v415, 0.0
    %v420 = vmax.f32 %v416, 0.0
    %v421 = vmax.f32 %v417, 0.0
    %v422 = vmax.f32 %v418, 0.0
    %423 = vxpose.xlu0.b32.start [1/16] %v419, 128
    %424 = vxpose.xlu0.b32.cont [2/16] %v420, 128
    %425 = vxpose.xlu0.b32.cont [3/16] 0.0, 128
    %426 = vxpose.xlu0.b32.cont [4/16] 0.0, 128
    %427 = vxpose.xlu0.b32.cont [5/16] 0.0, 128
    %428 = vxpose.xlu0.b32.cont [6/16] 0.0, 128
    %429 = vxpose.xlu0.b32.cont [7/16] 0.0, 128
    %430 = vxpose.xlu0.b32.cont [8/16] 0.0, 128
    %431 = vxpose.xlu0.b32.cont [9/16] 0.0, 128
    %432 = vxpose.xlu0.b32.cont [10/16] 0.0, 128
    %433 = vxpose.xlu0.b32.cont [11/16] 0.0, 128
    %434 = vxpose.xlu0.b32.cont [12/16] 0.0, 128
    %435 = vxpose.xlu0.b32.cont [13/16] 0.0, 128
    %436 = vxpose.xlu0.b32.cont [14/16] 0.0, 128
    %437 = vxpose.xlu0.b32.cont [15/16] 0.0, 128
    %438 = vxpose.xlu0.b32.end [16/16] 0.0, 128
    %v439 = vpop.trf.xlu0
    %v440 = vpop.trf.xlu0
    %v441 = vpop.trf.xlu0
    %v442 = vpop.trf.xlu0
    %v443 = vpop.trf.xlu0
    %v444 = vpop.trf.xlu0
    %v445 = vpop.trf.xlu0
    %v446 = vpop.trf.xlu0
    %v447 = vpop.trf.xlu0
    %v448 = vpop.trf.xlu0
    %v449 = vpop.trf.xlu0
    %v450 = vpop.trf.xlu0
    %v451 = vpop.trf.xlu0
    %v452 = vpop.trf.xlu0
    %v453 = vpop.trf.xlu0
    %v454 = vpop.trf.xlu0
    %455 = vxpose.xlu0.b32.start [1/16] %v421, 128
    %456 = vxpose.xlu0.b32.cont [2/16] %v422, 128
    %457 = vxpose.xlu0.b32.cont [3/16] 0.0, 128
    %458 = vxpose.xlu0.b32.cont [4/16] 0.0, 128
    %459 = vxpose.xlu0.b32.cont [5/16] 0.0, 128
    %460 = vxpose.xlu0.b32.cont [6/16] 0.0, 128
    %461 = vxpose.xlu0.b32.cont [7/16] 0.0, 128
    %462 = vxpose.xlu0.b32.cont [8/16] 0.0, 128
    %463 = vxpose.xlu0.b32.cont [9/16] 0.0, 128
    %464 = vxpose.xlu0.b32.cont [10/16] 0.0, 128
    %465 = vxpose.xlu0.b32.cont [11/16] 0.0, 128
    %466 = vxpose.xlu0.b32.cont [12/16] 0.0, 128
    %467 = vxpose.xlu0.b32.cont [13/16] 0.0, 128
    %468 = vxpose.xlu0.b32.cont [14/16] 0.0, 128
    %469 = vxpose.xlu0.b32.cont [15/16] 0.0, 128
    %470 = vxpose.xlu0.b32.end [16/16] 0.0, 128
    %v471 = vpop.trf.xlu0
    %v472 = vpop.trf.xlu0
    %v473 = vpop.trf.xlu0
    %v474 = vpop.trf.xlu0
    %v475 = vpop.trf.xlu0
    %v476 = vpop.trf.xlu0
    %v477 = vpop.trf.xlu0
    %v478 = vpop.trf.xlu0
    %v479 = vpop.trf.xlu0
    %v480 = vpop.trf.xlu0
    %v481 = vpop.trf.xlu0
    %v482 = vpop.trf.xlu0
    %v483 = vpop.trf.xlu0
    %v484 = vpop.trf.xlu0
    %v485 = vpop.trf.xlu0
    %v486 = vpop.trf.xlu0
    %vm487 = vcmask 130048
    %488 = vst.msk [vmem:[#allocation4] sm:$0xff] %vm487, %v439
    %489 = vst.msk [vmem:[#allocation4 + $0x8] sm:$0xff] %vm487, %v440
    %490 = vst.msk [vmem:[#allocation4 + $0x10] sm:$0xff] %vm487, %v471
    %491 = vst.msk [vmem:[#allocation4 + $0x18] sm:$0xff] %vm487, %v472
    // Predicated region
    $region22: #{tpu_custom_call.1} parent=1 // pred_check
      _
    $region23: #{tpu_custom_call.1} parent=1 // pred_check_branch
      %493 = sbr.rel (0) target = $region25
    $region24: #{tpu_custom_call.1} parent=1 // pred_region
      %s495 = ssub.s32 512, 512
      %496 = vsyncadd [#allocation5], %s495
      %s497 = sshll.u32 [#allocation4], 4
      %s498 = int_to_ptr.vmem [resolvable:$true] %s497
      %503 = dma.vmem_to_hbm [thread:$0]  %s498, 512, %s5, [#allocation5], 128, 128, 8
    $region25: #{tpu_custom_call.1} parent=1 // pred_fallthru
      _
    // Predicated region
    $region26: #{tpu_custom_call.1} parent=1 // pred_check
      _
    $region27: #{tpu_custom_call.1} parent=1 // pred_check_branch
      %505 = sbr.rel (0) target = $region29
    $region28: #{tpu_custom_call.1} parent=1 // pred_region
      %506 = dma.done [#allocation5], 512
    $region29: #{tpu_custom_call.1} parent=1 // pred_fallthru
      _
    %507 = vsyncpa [#allocation5], 1

</llo_original>
